<compile_context>
chip_gen: v5e
topology: v5e:2x2
jax: 0.10.0
libtpu: 0.0.40
codegen_flags: <defaults>
</compile_context>

<pallas_src>
import math
import functools

import jax
import jax.numpy as jnp
from jax import lax
from jax.experimental import pallas as pl
from jax.experimental.pallas import tpu as pltpu


def _round_up(x, m):
    return pl.cdiv(x, m) * m


# ---------------------------------------------------------------------------
# Kernel factory: closes over the static layer sizes.
#   weight slab layout (lane axis):  [ W1 | W2 | W3 ]  widths  H2 | H2 | OUT_W
#   bias   slab layout (lane axis):  [ B1 | B2 | B3 ]  widths  H2 | H2 | OUT_W
#   W1 = [a_w1 | c_w1]            rows 0:d_in
#   W2 = blockdiag(a_w2, c_w2)    rows 0:H2
#   W3 = [mu_w | sg_w | v_w | 0]  rows 0:H2   (actor rows 0:H, critic rows H:H2)
# ---------------------------------------------------------------------------
def _make_kernel(d_in, hidden, action, out_w):
    H = hidden
    H2 = 2 * hidden
    A = action

    def kernel(x_ref, w_ref, b_ref, out_ref):
        x = x_ref[...]                                      # [TB, d_in] f32

        # static slab slices (zero-cost views into resident VMEM weights)
        w1 = w_ref[0:d_in, 0:H2]                            # [d_in, 2H]
        w2 = w_ref[0:H2, H2:2 * H2]                         # [2H, 2H] block-diag
        w3 = w_ref[0:H2, 2 * H2:2 * H2 + out_w]             # [2H, OUT_W]
        b1 = b_ref[:, 0:H2]
        b2 = b_ref[:, H2:2 * H2]
        b3 = b_ref[:, 2 * H2:2 * H2 + out_w]

        # fused actor+critic trunk: hc = [h | c]  (both trunks use tanh)
        hc = jnp.tanh(jnp.dot(x, w1, preferred_element_type=jnp.float32) + b1)
        hc = jnp.tanh(jnp.dot(hc, w2, preferred_element_type=jnp.float32) + b2)

        # fused heads: columns [0:A)=mu pre-act, [A:2A)=sigma pre-act, [2A]=v
        z = jnp.dot(hc, w3, preferred_element_type=jnp.float32) + b3   # [TB, OUT_W]

        col = lax.broadcasted_iota(jnp.int32, z.shape, 1)
        mu_part = jnp.tanh(z)
        sg_part = jax.nn.softplus(z) + 0.001
        out = jnp.where(col < A, mu_part, jnp.where(col < 2 * A, sg_part, z))

        out_ref[...] = out.astype(out_ref.dtype)            # one dense store

    return kernel


# ---------------------------------------------------------------------------
# Parameter packing: individual [in,out] / [1,out] params -> two slabs.
# ---------------------------------------------------------------------------
def pack_params(params, d_in, hidden, action, out_w):
    H = hidden
    H2 = 2 * hidden
    A = action
    R = max(int(_round_up(d_in, 8)), H2)
    slab_w = 2 * H2 + out_w

    # W1 = [a_w1 | c_w1], zero-padded to R rows
    w1 = jnp.concatenate([params["a_w1"], params["c_w1"]], axis=1)       # [d_in, 2H]
    w1p = jnp.zeros((R, H2), jnp.float32).at[:d_in, :].set(w1)

    # W2 = blockdiag(a_w2, c_w2)
    w2p = jnp.zeros((R, H2), jnp.float32)
    w2p = w2p.at[:H, :H].set(params["a_w2"]).at[H:H2, H:H2].set(params["c_w2"])

    # W3 = heads: mu/sigma read actor half (rows 0:H), v reads critic half
    w3p = jnp.zeros((R, out_w), jnp.float32)
    w3p = (w3p.at[:H, :A].set(params["mu_w"])
               .at[:H, A:2 * A].set(params["sg_w"])
               .at[H:H2, 2 * A:2 * A + 1].set(params["v_w"]))

    w_slab = jnp.concatenate([w1p, w2p, w3p], axis=1)                    # [R, slab_w]

    b_slab = jnp.zeros((1, slab_w), jnp.float32)
    b_slab = (b_slab
              .at[:, 0:H].set(params["a_b1"])
              .at[:, H:H2].set(params["c_b1"])
              .at[:, H2:H2 + H].set(params["a_b2"])
              .at[:, H2 + H:2 * H2].set(params["c_b2"])
              .at[:, 2 * H2:2 * H2 + A].set(params["mu_b"])
              .at[:, 2 * H2 + A:2 * H2 + 2 * A].set(params["sg_b"])
              .at[:, 2 * H2 + 2 * A:2 * H2 + 2 * A + 1].set(params["v_b"]))
    return w_slab, b_slab


# ---------------------------------------------------------------------------
# Wrapper
# ---------------------------------------------------------------------------
def actor_critic_forward(states, params, *, block_b=256):
    """states: [B, input_size] f32; params: dict of [in,out] weights / [1,out] biases."""
    B, d_in = states.shape
    A = params["mu_w"].shape[1]
    H = params["a_w2"].shape[1]
    H2 = 2 * H
    out_w = int(_round_up(2 * A + 1, 128))          # lane-dense padded output width
    slab_w = 2 * H2 + out_w

    w_slab, b_slab = pack_params(params, d_in, H, A, out_w)
    R = w_slab.shape[0]

    # batch tile: multiple of 8, capped by block_b; pad the batch to a multiple
    tb = int(min(block_b, _round_up(B, 8)))
    b_pad = int(_round_up(B, tb))
    if b_pad != B:
        states = jnp.pad(states, ((0, b_pad - B), (0, 0)))
    grid = (b_pad // tb,)

    kernel = _make_kernel(d_in, H, A, out_w)

    cost = pl.CostEstimate(
        flops=2 * b_pad * (d_in * H2 + H2 * H2 + H2 * out_w),
        transcendentals=b_pad * (2 * H2 + 2 * out_w),
        bytes_accessed=4 * (b_pad * d_in + R * slab_w + slab_w + b_pad * out_w),
    )

    out = pl.pallas_call(
        kernel,
        out_shape=jax.ShapeDtypeStruct((b_pad, out_w), jnp.float32),
        grid=grid,
        in_specs=[
            pl.BlockSpec((tb, d_in), lambda i: (i, 0)),     # batch-tiled states
            pl.BlockSpec((R, slab_w), lambda i: (0, 0)),    # weights: resident
            pl.BlockSpec((1, slab_w), lambda i: (0, 0)),    # biases:  resident
        ],
        out_specs=pl.BlockSpec((tb, out_w), lambda i: (i, 0)),
        compiler_params=pltpu.CompilerParams(
            dimension_semantics=("parallel",),              # megacore / v7x 2-TC
        ),
        cost_estimate=cost,
    )(states, w_slab, b_slab)

    mu = out[:B, :A]
    sigma = out[:B, A:2 * A]
    v = out[:B, 2 * A:2 * A + 1]
    return mu, sigma, v


# ---------------------------------------------------------------------------
# Deterministic PyTorch-style init (nn.Linear default U(-1/sqrt(fan_in), ...)),
# weights materialized directly in [in, out] layout (W.T of PyTorch).
# ---------------------------------------------------------------------------
def init_linear(key, fan_in, fan_out):
    kw, kb = jax.random.split(key)
    bound = 1.0 / math.sqrt(fan_in)
    w = jax.random.uniform(kw, (fan_in, fan_out), jnp.float32, -bound, bound)
    b = jax.random.uniform(kb, (1, fan_out), jnp.float32, -bound, bound)
    return w, b


def init_params(key, input_size, action_size, actor_hidden, critic_hidden):
    keys = jax.random.split(key, 7)
    p = {}
    p["a_w1"], p["a_b1"] = init_linear(keys[0], input_size, actor_hidden[0])
    p["a_w2"], p["a_b2"] = init_linear(keys[1], actor_hidden[0], actor_hidden[1])
    p["mu_w"], p["mu_b"] = init_linear(keys[2], actor_hidden[1], action_size)
    p["sg_w"], p["sg_b"] = init_linear(keys[3], actor_hidden[1], action_size)
    p["c_w1"], p["c_b1"] = init_linear(keys[4], input_size, critic_hidden[0])
    p["c_w2"], p["c_b2"] = init_linear(keys[5], critic_hidden[0], critic_hidden[1])
    p["v_w"], p["v_b"] = init_linear(keys[6], critic_hidden[1], 1)
    return p


# ---------------------------------------------------------------------------
# Pure-JAX reference (same math as the PyTorch forward).
# ---------------------------------------------------------------------------
def reference_forward(states, p):
    h = jnp.tanh(states @ p["a_w1"] + p["a_b1"])
    h = jnp.tanh(h @ p["a_w2"] + p["a_b2"])
    mu = jnp.tanh(h @ p["mu_w"] + p["mu_b"])
    sigma = jax.nn.softplus(h @ p["sg_w"] + p["sg_b"]) + 0.001
    c = jnp.tanh(states @ p["c_w1"] + p["c_b1"])
    c = jnp.tanh(c @ p["c_w2"] + p["c_b2"])
    v = c @ p["v_w"] + p["v_b"]
    return mu, sigma, v


if __name__ == "__main__":
    key = jax.random.PRNGKey(0)
    k_params, k_states = jax.random.split(key)

    input_size = 16
    action_size = 4
    actor_hidden = [32, 32]
    critic_hidden = [32, 32]
    batch = 8

    params = init_params(k_params, input_size, action_size, actor_hidden, critic_hidden)
    states = jax.random.normal(k_states, (batch, input_size), jnp.float32)

    mu, sigma, v = actor_critic_forward(states, params)
    jax.block_until_ready((mu, sigma, v))

    mu_r, sigma_r, v_r = reference_forward(states, params)
    assert mu.shape == (batch, action_size)
    assert sigma.shape == (batch, action_size)
    assert v.shape == (batch, 1)
    assert jnp.allclose(mu, mu_r, atol=1e-5)
    assert jnp.allclose(sigma, sigma_r, atol=1e-5)
    assert jnp.allclose(v, v_r, atol=1e-5)
    assert bool(jnp.all(sigma > 0.0))

    print("KERNEL_OK")
</pallas_src>

<mosaic_0001>
module attributes {stable_mosaic.version = 11 : i64} {
  func.func @kernel(%arg0: i32, %arg1: memref<8x16xf32, #tpu.memory_space<vmem>>, %arg2: memref<64x256xf32, #tpu.memory_space<vmem>>, %arg3: memref<1x256xf32, #tpu.memory_space<vmem>>, %arg4: memref<8x128xf32, #tpu.memory_space<vmem>>) attributes {dimension_semantics = [#tpu.dimension_semantics<parallel>], iteration_bounds = array<i64: 1>, scalar_prefetch = 0 : i64, scratch_operands = 0 : i64, tpu.core_type = #tpu.core_type<tc>, window_params = [{transform_indices = @transform_0, window_bounds = array<i64: 8, 16>}, {pipeline_mode = #tpu.pipeline_mode<synchronous>, transform_indices = @transform_1, window_bounds = array<i64: 64, 256>}, {pipeline_mode = #tpu.pipeline_mode<synchronous>, transform_indices = @transform_2, window_bounds = array<i64: 1, 256>}, {transform_indices = @transform_3, window_bounds = array<i64: 8, 128>}]} {
    %c0 = arith.constant 0 : index
    %c0_0 = arith.constant 0 : index
    %0 = vector.load %arg1[%c0, %c0_0] : memref<8x16xf32, #tpu.memory_space<vmem>>, vector<8x16xf32>
    %c0_1 = arith.constant 0 : index
    %c0_2 = arith.constant 0 : index
    %1 = vector.load %arg2[%c0_1, %c0_2] : memref<64x256xf32, #tpu.memory_space<vmem>>, vector<16x64xf32>
    %c0_3 = arith.constant 0 : index
    %c64 = arith.constant 64 : index
    %2 = vector.load %arg2[%c0_3, %c64] : memref<64x256xf32, #tpu.memory_space<vmem>>, vector<64x64xf32>
    %c0_4 = arith.constant 0 : index
    %c128 = arith.constant 128 : index
    %3 = vector.load %arg2[%c0_4, %c128] : memref<64x256xf32, #tpu.memory_space<vmem>>, vector<64x128xf32>
    %c0_5 = arith.constant 0 : index
    %c0_6 = arith.constant 0 : index
    %4 = vector.load %arg3[%c0_5, %c0_6] : memref<1x256xf32, #tpu.memory_space<vmem>>, vector<1x64xf32>
    %c0_7 = arith.constant 0 : index
    %c64_8 = arith.constant 64 : index
    %5 = vector.load %arg3[%c0_7, %c64_8] : memref<1x256xf32, #tpu.memory_space<vmem>>, vector<1x64xf32>
    %c0_9 = arith.constant 0 : index
    %c128_10 = arith.constant 128 : index
    %6 = vector.load %arg3[%c0_9, %c128_10] : memref<1x256xf32, #tpu.memory_space<vmem>>, vector<1x128xf32>
    %cst = arith.constant dense<0.000000e+00> : vector<8x64xf32>
    %7 = tpu.matmul %0, %1, %cst {dimension_numbers = #tpu.dot_dimension_numbers<[1], [0], [0], [1], [0, 0, 1, 1], [], []>} : vector<8x16xf32>, vector<16x64xf32>, vector<8x64xf32> -> vector<8x64xf32>
    %8 = vector.broadcast %4 : vector<1x64xf32> to vector<8x64xf32>
    %9 = arith.addf %7, %8 : vector<8x64xf32>
    %10 = math.tanh %9 : vector<8x64xf32>
    %cst_11 = arith.constant dense<0.000000e+00> : vector<8x64xf32>
    %11 = tpu.matmul %10, %2, %cst_11 {dimension_numbers = #tpu.dot_dimension_numbers<[1], [0], [0], [1], [0, 0, 1, 1], [], []>} : vector<8x64xf32>, vector<64x64xf32>, vector<8x64xf32> -> vector<8x64xf32>
    %12 = vector.broadcast %5 : vector<1x64xf32> to vector<8x64xf32>
    %13 = arith.addf %11, %12 : vector<8x64xf32>
    %14 = math.tanh %13 : vector<8x64xf32>
    %cst_12 = arith.constant dense<0.000000e+00> : vector<8x128xf32>
    %15 = tpu.matmul %14, %3, %cst_12 {dimension_numbers = #tpu.dot_dimension_numbers<[1], [0], [0], [1], [0, 0, 1, 1], [], []>} : vector<8x64xf32>, vector<64x128xf32>, vector<8x128xf32> -> vector<8x128xf32>
    %16 = vector.broadcast %6 : vector<1x128xf32> to vector<8x128xf32>
    %17 = arith.addf %15, %16 : vector<8x128xf32>
    %18 = tpu.iota {dimensions = array<i32: 1>} : vector<8x128xi32>
    %19 = math.tanh %17 : vector<8x128xf32>
    %cst_13 = arith.constant 0.000000e+00 : f32
    %20 = vector.broadcast %cst_13 : f32 to vector<8x128xf32>
    %21 = arith.maximumf %17, %20 : vector<8x128xf32>
    %22 = vector.broadcast %cst_13 : f32 to vector<8x128xf32>
    %23 = arith.subf %17, %22 : vector<8x128xf32>
    %24 = arith.cmpf one, %23, %23 : vector<8x128xf32>
    %25 = vector.broadcast %cst_13 : f32 to vector<8x128xf32>
    %26 = arith.addf %17, %25 : vector<8x128xf32>
    %27 = math.absf %23 : vector<8x128xf32>
    %cst_14 = arith.constant 0.000000e+00 : f32
    %28 = vector.broadcast %cst_14 : f32 to vector<8x128xf32>
    %29 = arith.subf %28, %27 : vector<8x128xf32>
    %30 = math.exp %29 : vector<8x128xf32>
    %31 = math.log1p %30 : vector<8x128xf32>
    %32 = arith.addf %21, %31 : vector<8x128xf32>
    %33 = arith.select %24, %26, %32 : vector<8x128xi1>, vector<8x128xf32>
    %cst_15 = arith.constant 1.000000e-03 : f32
    %34 = vector.broadcast %cst_15 : f32 to vector<8x128xf32>
    %35 = arith.addf %33, %34 : vector<8x128xf32>
    %c4_i32 = arith.constant 4 : i32
    %36 = vector.broadcast %c4_i32 : i32 to vector<8x128xi32>
    %37 = arith.cmpi slt, %18, %36 : vector<8x128xi32>
    %c8_i32 = arith.constant 8 : i32
    %38 = vector.broadcast %c8_i32 : i32 to vector<8x128xi32>
    %39 = arith.cmpi slt, %18, %38 : vector<8x128xi32>
    %40 = arith.select %39, %35, %17 : vector<8x128xi1>, vector<8x128xf32>
    %41 = arith.select %37, %19, %40 : vector<8x128xi1>, vector<8x128xf32>
    %c0_16 = arith.constant 0 : index
    %c0_17 = arith.constant 0 : index
    %42 = vector.load %arg4[%c0_16, %c0_17] : memref<8x128xf32, #tpu.memory_space<vmem>>, vector<8x128xf32>
    tpu.vector_store %arg4[%c0_16, %c0_17], %41 {strides = array<i32>} : memref<8x128xf32, #tpu.memory_space<vmem>>, vector<8x128xf32>,
    return
  }
  func.func @transform_0(%arg0: i32) -> (i32, i32) {
    %c0_i32 = arith.constant 0 : i32
    %c0_i32_0 = arith.constant 0 : i32
    return %arg0, %c0_i32 : i32, i32
  }
  func.func @transform_1(%arg0: i32) -> (i32, i32) {
    %c0_i32 = arith.constant 0 : i32
    %c0_i32_0 = arith.constant 0 : i32
    %c0_i32_1 = arith.constant 0 : i32
    return %c0_i32, %c0_i32_0 : i32, i32
  }
  func.func @transform_2(%arg0: i32) -> (i32, i32) {
    %c0_i32 = arith.constant 0 : i32
    %c0_i32_0 = arith.constant 0 : i32
    %c0_i32_1 = arith.constant 0 : i32
    return %c0_i32, %c0_i32_0 : i32, i32
  }
  func.func @transform_3(%arg0: i32) -> (i32, i32) {
    %c0_i32 = arith.constant 0 : i32
    %c0_i32_0 = arith.constant 0 : i32
    return %arg0, %c0_i32 : i32, i32
  }
}

</mosaic_0001>

<llo_original>
// kernel: tpu_custom_call.1
$region0: #{tpu_custom_call.1}
  #allocation0 [shape = 'u32[]', space=smem, size = 0x4, offset = 0x4, fixed_abs, tag = 'smem constant byte address 0x4 - core index']
  #allocation1 [shape = 'u32[72,128]{1,0:T(1,128)}', space=vmem, size = 0x9000, scoped, tag = 'internal scratch']
  %s0 = inlined_call_operand.hbm [shape: f32[8,16], index: 0, kind: input, shape index: {}]
  %s1 = inlined_call_operand.hbm [shape: f32[64,256], index: 1, kind: input, shape index: {}]
  %s2 = inlined_call_operand.hbm [shape: f32[1,256], index: 2, kind: input, shape index: {}]
  %s3 = inlined_call_operand.hbm [shape: f32[8,128], index: 3, kind: output, shape index: {}]
  %s4 = sld [smem:[#allocation0]]
  $region34: #{tpu_custom_call.1} parent=0
    _
  %s6 = ssub.s32 1, %s4
  %s7 = scalar_select 0, %s6, %s4
  $region1: #{tpu_custom_call.1} parent=0
    #allocation2 [shape = 'u8[4096]{0}', space=vmem, size = 0x1000, scoped, tag = 'input window, operand 0, single buffered']
    #allocation3 [shape = 's32[1]{0}', space=sflag, size = 0x4, scoped, tag = 'scoped memory for tpu_custom_call.1']
    #allocation4 [shape = 's32[1]{0}', space=sflag, size = 0x4, scoped, tag = 'scoped memory for tpu_custom_call.1']
    #allocation5 [shape = 'u8[65536]{0}', space=vmem, size = 0x10000, scoped, tag = 'input window, operand 1, single buffered']
    #allocation6 [shape = 's32[1]{0}', space=sflag, size = 0x4, scoped, tag = 'scoped memory for tpu_custom_call.1']
    #allocation7 [shape = 'u8[1024]{0}', space=vmem, size = 0x400, scoped, tag = 'input window, operand 2, single buffered']
    #allocation8 [shape = 'u8[4096]{0}', space=vmem, size = 0x1000, scoped, tag = 'output window, operand 0, single buffered']
    %8 = vsyncpa [#allocation3], 0
    %9 = vsyncpa [#allocation6], 0
    %10 = vsyncpa [#allocation4], 0
    // Predicated region
    $region2: #{tpu_custom_call.1} parent=1 // pred_check
      _
    $region3: #{tpu_custom_call.1} parent=1 // pred_check_branch
      %12 = sbr.rel (0) target = $region5
    $region4: #{tpu_custom_call.1} parent=1 // pred_region
      %14 = vsyncadd [#allocation3], 0
      %s16 = sshll.u32 %s0, 4
      %s17 = int_to_ptr.hbm [resolvable:$true] %s16
      %s18 = sshll.u32 [#allocation2], 4
      %s19 = int_to_ptr.vmem [resolvable:$true] %s18
      %21 = dma.hbm_to_vmem [thread:$0]  %s17, 128, %s19, [#allocation3]
    $region5: #{tpu_custom_call.1} parent=1 // pred_fallthru
      _
    // Predicated region
    $region6: #{tpu_custom_call.1} parent=1 // pred_check
      _
    $region7: #{tpu_custom_call.1} parent=1 // pred_check_branch
      %23 = sbr.rel (0) target = $region9
    $region8: #{tpu_custom_call.1} parent=1 // pred_region
      %25 = vsyncadd [#allocation6], 0
      %s26 = sshll.u32 %s1, 4
      %s27 = int_to_ptr.hbm [resolvable:$true] %s26
      %s28 = sshll.u32 [#allocation5], 4
      %s29 = int_to_ptr.vmem [resolvable:$true] %s28
      %34 = dma.hbm_to_vmem [thread:$0]  %s27, 2048, %s29, [#allocation6], 256, 256, 16
    $region9: #{tpu_custom_call.1} parent=1 // pred_fallthru
      _
    // Predicated region
    $region10: #{tpu_custom_call.1} parent=1 // pred_check
      _
    $region11: #{tpu_custom_call.1} parent=1 // pred_check_branch
      %36 = sbr.rel (0) target = $region13
    $region12: #{tpu_custom_call.1} parent=1 // pred_region
      %38 = vsyncadd [#allocation6], 0
      %s40 = sshll.u32 %s2, 4
      %s41 = int_to_ptr.hbm [resolvable:$true] %s40
      %s42 = sshll.u32 [#allocation7], 4
      %s43 = int_to_ptr.vmem [resolvable:$true] %s42
      %45 = dma.hbm_to_vmem [thread:$0]  %s41, 32, %s43, [#allocation6]
    $region13: #{tpu_custom_call.1} parent=1 // pred_fallthru
      _
    // Predicated region
    $region14: #{tpu_custom_call.1} parent=1 // pred_check
      _
    $region15: #{tpu_custom_call.1} parent=1 // pred_check_branch
      %47 = sbr.rel (0) target = $region17
    $region16: #{tpu_custom_call.1} parent=1 // pred_region
      %49 = dma.done [#allocation3], 128
    $region17: #{tpu_custom_call.1} parent=1 // pred_fallthru
      _
    // Predicated region
    $region18: #{tpu_custom_call.1} parent=1 // pred_check
      _
    $region19: #{tpu_custom_call.1} parent=1 // pred_check_branch
      %51 = sbr.rel (0) target = $region21
    $region20: #{tpu_custom_call.1} parent=1 // pred_region
      %53 = dma.done [#allocation6], 2048
    $region21: #{tpu_custom_call.1} parent=1 // pred_fallthru
      _
    // Predicated region
    $region22: #{tpu_custom_call.1} parent=1 // pred_check
      _
    $region23: #{tpu_custom_call.1} parent=1 // pred_check_branch
      %55 = sbr.rel (0) target = $region25
    $region24: #{tpu_custom_call.1} parent=1 // pred_region
      %57 = dma.done [#allocation6], 32
    $region25: #{tpu_custom_call.1} parent=1 // pred_fallthru
      _
    %v58 = vld [vmem:[#allocation2] sm:$0xff]
    %v59 = vld [vmem:[#allocation5] sm:$0xff]
    %v60 = vld [vmem:[#allocation5 + $0x10] sm:$0xff]
    %v61 = vld [vmem:[#allocation5 + $0x20] sm:$0xff]
    %v62 = vld [vmem:[#allocation5 + $0x30] sm:$0xff]
    %v63 = vld [vmem:[#allocation5 + $0x40] sm:$0xff]
    %v64 = vld [vmem:[#allocation5 + $0x50] sm:$0xff]
    %v65 = vld [vmem:[#allocation5 + $0x60] sm:$0xff]
    %v66 = vld [vmem:[#allocation5 + $0x70] sm:$0xff]
    %v67 = vld [vmem:[#allocation5 + $0x8] sm:$0xff]
    %v68 = vld [vmem:[#allocation5 + $0x18] sm:$0xff]
    %v69 = vld [vmem:[#allocation5 + $0x28] sm:$0xff]
    %v70 = vld [vmem:[#allocation5 + $0x38] sm:$0xff]
    %v71 = vld [vmem:[#allocation5 + $0x48] sm:$0xff]
    %v72 = vld [vmem:[#allocation5 + $0x58] sm:$0xff]
    %v73 = vld [vmem:[#allocation5 + $0x68] sm:$0xff]
    %v74 = vld [vmem:[#allocation5 + $0x78] sm:$0xff]
    %v75 = vld [vmem:[#allocation7] sm:$0x1]
    %v76 = vld [vmem:[#allocation7 + $0x1] sm:$0x1]
    %v78 = vperm.slane %v75, 0
    %vm80 = vcmask 130048
    %v82 = vsel %vm80, %v58, 0
    %84 = vmatpush.msra.mxu0 0.0
    %85 = vmatpush.msra.mxu0 0.0
    %86 = vmatpush.msra.mxu0 0.0
    %87 = vmatpush.msra.mxu0 0.0
    %88 = vmatpush.msra.mxu0 0.0
    %89 = vmatpush.msra.mxu0 0.0
    %90 = vmatpush.msra.mxu0 0.0
    %91 = vmatpush.msra.mxu0 0.0
    %92 = vmatpush.msra.mxu0 0.0
    %93 = vmatpush.msra.mxu0 0.0
    %94 = vmatpush.msra.mxu0 0.0
    %95 = vmatpush.msra.mxu0 0.0
    %96 = vmatpush.msra.mxu0 0.0
    %97 = vmatpush.msra.mxu0 0.0
    %98 = vmatpush.msra.mxu0 %v60
    %99 = vmatpush.msra.mxu0 %v59
    %100 = vmatmul.f32.gmra.mxu0 %v82
    %v101 = vpop.f32.mrf.mxu0
    %v102 = vadd.f32 %v78, %v101
    %103 = vdwg.mxu0
    %v104 = vtanh.pop %v102
    %113 = vrot.lane.b32.xlu0 %v59, 64
    %v114 = vpop.permute.xlu0 %113
    %115 = vrot.lane.b32.xlu0 %v60, 64
    %v116 = vpop.permute.xlu0 %115
    %117 = vrot.lane.b32.xlu0 %v61, 64
    %v118 = vpop.permute.xlu0 %117
    %119 = vrot.lane.b32.xlu0 %v62, 64
    %v120 = vpop.permute.xlu0 %119
    %121 = vrot.lane.b32.xlu0 %v63, 64
    %v122 = vpop.permute.xlu0 %121
    %123 = vrot.lane.b32.xlu0 %v64, 64
    %v124 = vpop.permute.xlu0 %123
    %125 = vrot.lane.b32.xlu0 %v65, 64
    %v126 = vpop.permute.xlu0 %125
    %127 = vrot.lane.b32.xlu0 %v66, 64
    %v128 = vpop.permute.xlu0 %127
    %137 = vrot.lane.b32.xlu0 %v78, 64
    %v138 = vpop.permute.xlu0 %137
    %vm140 = vcmask 523264
    %v142 = vsel %vm140, %v104, 0
    %144 = vmatpush.msra.mxu0 0.0
    %145 = vmatpush.msra.mxu0 0.0
    %146 = vmatpush.msra.mxu0 0.0
    %147 = vmatpush.msra.mxu0 0.0
    %148 = vmatpush.msra.mxu0 0.0
    %149 = vmatpush.msra.mxu0 0.0
    %150 = vmatpush.msra.mxu0 0.0
    %151 = vmatpush.msra.mxu0 0.0
    %152 = vmatpush.msra.mxu0 %v128
    %153 = vmatpush.msra.mxu0 %v126
    %154 = vmatpush.msra.mxu0 %v124
    %155 = vmatpush.msra.mxu0 %v122
    %156 = vmatpush.msra.mxu0 %v120
    %157 = vmatpush.msra.mxu0 %v118
    %158 = vmatpush.msra.mxu0 %v116
    %159 = vmatpush.msra.mxu0 %v114
    %160 = vmatmul.f32.gmra.mxu0 %v142
    %v161 = vpop.f32.mrf.mxu0
    %v162 = vadd.f32 %v138, %v161
    %163 = vdwg.mxu0
    %v164 = vtanh.pop %v162
    %v166 = vperm.slane %v76, 0
    %v169 = vsel %vm140, %v164, 0
    %171 = vmatpush.msra.mxu0 0.0
    %172 = vmatpush.msra.mxu0 0.0
    %173 = vmatpush.msra.mxu0 0.0
    %174 = vmatpush.msra.mxu0 0.0
    %175 = vmatpush.msra.mxu0 0.0
    %176 = vmatpush.msra.mxu0 0.0
    %177 = vmatpush.msra.mxu0 0.0
    %178 = vmatpush.msra.mxu0 0.0
    %179 = vmatpush.msra.mxu0 %v74
    %180 = vmatpush.msra.mxu0 %v73
    %181 = vmatpush.msra.mxu0 %v72
    %182 = vmatpush.msra.mxu0 %v71
    %183 = vmatpush.msra.mxu0 %v70
    %184 = vmatpush.msra.mxu0 %v69
    %185 = vmatpush.msra.mxu0 %v68
    %186 = vmatpush.msra.mxu0 %v67
    %187 = vmatmul.f32.gmra.mxu0 %v169
    %v188 = vpop.f32.mrf.mxu0
    %v189 = vadd.f32 %v166, %v188
    %190 = vdwg.mxu0
    %v191 = vlaneseq
    %v192 = vand.u32 %v191, 127
    %v193 = vtanh.pop %v189
    %v194 = vmax.f32 %v189, 0.0
    %vm195 = vcmp.ne.f32.partialorder %v189, %v189
    %v196 = vadd.f32 %v189, 0.0
    %v197 = vand.u32 2147483647, %v189
    %v198 = vsub.f32 0.0, %v197
    %v199 = vmul.f32 %v198, 1.442695
    %v200 = vpow.pop %v199
    %v201 = vadd.f32 %v200, 1.0
    %v202 = vlog2.pop %v201
    %v203 = vmul.f32 %v202, 0.6931472
    %v204 = vmul.f32 -0.5, %v200
    %v205 = vadd.f32 %v204, 1.0
    %v206 = vmul.f32 %v205, %v200
    %v207 = vand.u32 2147483647, %v200
    %vm208 = vcmp.lt.f32.partialorder %v207, 0.0004427343
    %v209 = vsel %vm208, %v206, %v203
    %v210 = vadd.f32 %v194, %v209
    %v211 = vsel %vm195, %v196, %v210
    %v212 = vadd.f32 %v211, 0.001
    %vm213 = vcmp.lt.s32.totalorder %v192, 4
    %vm214 = vcmp.lt.s32.totalorder %v192, 8
    %v215 = vsel %vm214, %v212, %v189
    %v216 = vsel %vm213, %v193, %v215
    %217 = vst [vmem:[#allocation8] sm:$0xff] %v216
    // Predicated region
    $region26: #{tpu_custom_call.1} parent=1 // pred_check
      _
    $region27: #{tpu_custom_call.1} parent=1 // pred_check_branch
      %219 = sbr.rel (0) target = $region29
    $region28: #{tpu_custom_call.1} parent=1 // pred_region
      %221 = vsyncadd [#allocation4], 0
      %s223 = sshll.u32 [#allocation8], 4
      %s224 = int_to_ptr.vmem [resolvable:$true] %s223
      %s225 = sshll.u32 %s3, 4
      %s226 = int_to_ptr.hbm [resolvable:$true] %s225
      %228 = dma.vmem_to_hbm [thread:$0]  %s224, 128, %s226, [#allocation4]
    $region29: #{tpu_custom_call.1} parent=1 // pred_fallthru
      _
    // Predicated region
    $region30: #{tpu_custom_call.1} parent=1 // pred_check
      _
    $region31: #{tpu_custom_call.1} parent=1 // pred_check_branch
      %230 = sbr.rel (0) target = $region33
    $region32: #{tpu_custom_call.1} parent=1 // pred_region
      %232 = dma.done [#allocation4], 128
    $region33: #{tpu_custom_call.1} parent=1 // pred_fallthru
      _
    %233 = vsyncpa [#allocation3], 1
    %234 = vsyncpa [#allocation6], 1
    %235 = vsyncpa [#allocation4], 1

</llo_original>
